<compile_context>
chip_gen: v7x
topology: tpu7x:2x2x1
jax: 0.10.0
libtpu: 0.0.40
codegen_flags: <defaults>
</compile_context>

<pallas_src>
import numpy as np
import jax
import jax.numpy as jnp
from jax.experimental import pallas as pl
from jax.experimental.pallas import tpu as pltpu


# ---------------- parameter construction (plain numpy, deterministic) -------

def build_spm_fdm_mats(n_r: int):
    """Replicates SPMFdm.calc_matA / calc_matB (depend only on n_r).

    Returns (matA_f32, matB_f32, matW_f32) where
      matW = concat([matA, matB], axis=1)   has shape [n_r-1, n_r]
    and is built in float64 before a single cast to float32.  With
      state_T [n_r, B]:   out_T = matW @ state_T
    which equals (state[:, :n_r-1] @ matA.T + state[:, n_r-1:] @ matB.T).T
    """
    # matM1
    M1 = np.zeros((n_r - 1, n_r - 1), dtype=np.float64)
    for i in range(n_r - 1):
        M1[i, i] = -2.0
        if i >= 1:
            M1[i, i - 1] = i / (i + 1)
        if i <= n_r - 3:
            M1[i, i + 1] = (i + 2) / (i + 1)
    # matM2
    M2 = np.zeros((n_r - 1, 2), dtype=np.float64)
    M2[n_r - 2, 1] = n_r / (n_r - 1)
    # matN1
    N1 = np.zeros((2, n_r - 1), dtype=np.float64)
    N1[0, 0] = 4.0
    N1[0, 1] = -1.0
    N1[1, n_r - 3] = 1.0
    N1[1, n_r - 2] = -4.0
    # matN2, matN3
    N2 = np.array([[-3.0, 0.0], [0.0, 3.0]], dtype=np.float64)
    N3 = np.array([[0.0], [1.0]], dtype=np.float64)

    N2_inv = np.linalg.inv(N2)
    matA = M1 - M2 @ N2_inv @ N1          # [n_r-1, n_r-1]
    matB = M2 @ N2_inv @ N3               # [n_r-1, 1]

    matW = np.concatenate([matA, matB], axis=1)   # [n_r-1, n_r]

    return (matA.astype(np.float32),
            matB.astype(np.float32),
            matW.astype(np.float32))


# ---------------- tiling helpers ---------------------------------------------

def _cdiv(a: int, b: int) -> int:
    return -(-a // b)


def _round_up(x: int, m: int) -> int:
    return _cdiv(x, m) * m


def _pick_tile_b(B: int, tile_b: int) -> int:
    """Batch (lane-axis) tile: multiple of 128, capped at tile_b, and — when
    the batch is large enough — small enough that the grid has >= 2 steps so
    the pipeline overlaps and both v7x TensorCores get work."""
    TB = _round_up(max(1, min(tile_b, B)), 128)
    if B >= 256 and _cdiv(B, TB) < 2:
        TB = _round_up(_cdiv(B, 2), 128)
    return TB


# ---------------- Pallas kernel ----------------------------------------------

def spm_fdm_kernel(x_ref, w_ref, o_ref):
    # x_ref: [n_r, TB]      state tile, batch on the 128-lane axis
    # w_ref: [n_r-1, n_r]   resident weight  W = [matA | matB]
    # o_ref: [n_r-1, TB]    dxdt tile (transposed), lane-dense stores
    o_ref[...] = jnp.dot(w_ref[...], x_ref[...],
                         preferred_element_type=jnp.float32)


def spm_fdm_forward_T(state_T, matW, *, tile_b: int = 16384):
    """Lane-dense core.  state_T: [n_r, B] f32, matW: [n_r-1, n_r] f32.

    Returns dxdt_T: [n_r-1, B] f32.  No padding / slicing passes: the ragged
    last batch tile (if any) is a Pallas-masked partial edge block.
    """
    n_r, B = state_T.shape
    n_out = n_r - 1

    TB = _pick_tile_b(B, tile_b)
    grid = (_cdiv(B, TB),)

    return pl.pallas_call(
        spm_fdm_kernel,
        out_shape=jax.ShapeDtypeStruct((n_out, B), jnp.float32),
        grid=grid,
        in_specs=[
            # streamed batch tile, double-buffered by the Pallas pipeline
            pl.BlockSpec((n_r, TB), lambda i: (0, i)),
            # resident weight: constant block index -> fetched once
            pl.BlockSpec((n_out, n_r), lambda i: (0, 0)),
        ],
        out_specs=pl.BlockSpec((n_out, TB), lambda i: (0, i)),
        compiler_params=pltpu.CompilerParams(
            dimension_semantics=("parallel",)),   # shards batch tiles across TCs (v7x)
    )(state_T, matW)


def spm_fdm_forward(state, matW, *, tile_b: int = 16384):
    """Contract-preserving wrapper: state [B, n_r] f32 -> dxdt [B, n_r-1] f32.

    One transpose on each side of the lane-dense kernel (accepted cost when
    the external [B, n_r-1] layout contract is fixed).
    """
    out_T = spm_fdm_forward_T(jnp.transpose(state), matW, tile_b=tile_b)
    return jnp.transpose(out_T)


# ---------------- driver ------------------------------------------------------

if __name__ == "__main__":
    batch = 256
    n_r = 9  # small radial discretization

    matA_np, matB_np, matW_np = build_spm_fdm_mats(n_r)
    matA = jnp.asarray(matA_np)
    matB = jnp.asarray(matB_np)
    matW = jnp.asarray(matW_np)

    key = jax.random.PRNGKey(0)
    k0, k1 = jax.random.split(key)
    state = jax.random.normal(k0, (batch, n_r), dtype=jnp.float32)

    # tile_b=128 so the toy batch still exercises the batch grid (grid=(2,)).
    out = spm_fdm_forward(state, matW, tile_b=128)
    out = jax.block_until_ready(out)

    # Pure-JAX reference (same semantics as the PyTorch forward).
    ref = state[:, : n_r - 1] @ matA.T + state[:, n_r - 1 : n_r] @ matB.T
    np.testing.assert_allclose(np.asarray(out), np.asarray(ref),
                               rtol=1e-5, atol=1e-5)

    # Ragged batch (not a multiple of 128): exercises the masked partial edge
    # block — there is no jnp.pad / out[:B] HBM pass anymore.
    state2 = jax.random.normal(k1, (200, n_r), dtype=jnp.float32)
    out2 = jax.block_until_ready(spm_fdm_forward(state2, matW))
    ref2 = state2[:, : n_r - 1] @ matA.T + state2[:, n_r - 1 : n_r] @ matB.T
    np.testing.assert_allclose(np.asarray(out2), np.asarray(ref2),
                               rtol=1e-5, atol=1e-5)

    print("KERNEL_OK")
</pallas_src>

<mosaic_0001>
module attributes {stable_mosaic.version = 11 : i64} {
  func.func @spm_fdm_kernel(%arg0: i32, %arg1: memref<9x128xf32, #tpu.memory_space<vmem>>, %arg2: memref<8x9xf32, #tpu.memory_space<vmem>>, %arg3: memref<8x128xf32, #tpu.memory_space<vmem>>) attributes {dimension_semantics = [#tpu.dimension_semantics<parallel>], iteration_bounds = array<i64: 2>, scalar_prefetch = 0 : i64, scratch_operands = 0 : i64, tpu.core_type = #tpu.core_type<tc>, window_params = [{transform_indices = @transform_0, window_bounds = array<i64: 9, 128>}, {pipeline_mode = #tpu.pipeline_mode<synchronous>, transform_indices = @transform_1, window_bounds = array<i64: 8, 9>}, {transform_indices = @transform_2, window_bounds = array<i64: 8, 128>}]} {
    %c0 = arith.constant 0 : index
    %c0_0 = arith.constant 0 : index
    %0 = vector.load %arg2[%c0, %c0_0] : memref<8x9xf32, #tpu.memory_space<vmem>>, vector<8x9xf32>
    %c0_1 = arith.constant 0 : index
    %c0_2 = arith.constant 0 : index
    %1 = vector.load %arg1[%c0_1, %c0_2] : memref<9x128xf32, #tpu.memory_space<vmem>>, vector<9x128xf32>
    %cst = arith.constant dense<0.000000e+00> : vector<8x128xf32>
    %2 = tpu.matmul %0, %1, %cst {dimension_numbers = #tpu.dot_dimension_numbers<[1], [0], [0], [1], [0, 0, 1, 1], [], []>} : vector<8x9xf32>, vector<9x128xf32>, vector<8x128xf32> -> vector<8x128xf32>
    %c0_3 = arith.constant 0 : index
    %c0_4 = arith.constant 0 : index
    %3 = vector.load %arg3[%c0_3, %c0_4] : memref<8x128xf32, #tpu.memory_space<vmem>>, vector<8x128xf32>
    tpu.vector_store %arg3[%c0_3, %c0_4], %2 {strides = array<i32>} : memref<8x128xf32, #tpu.memory_space<vmem>>, vector<8x128xf32>,
    return
  }
  func.func @transform_0(%arg0: i32) -> (i32, i32) {
    %c0_i32 = arith.constant 0 : i32
    %c0_i32_0 = arith.constant 0 : i32
    return %c0_i32, %arg0 : i32, i32
  }
  func.func @transform_1(%arg0: i32) -> (i32, i32) {
    %c0_i32 = arith.constant 0 : i32
    %c0_i32_0 = arith.constant 0 : i32
    %c0_i32_1 = arith.constant 0 : i32
    return %c0_i32, %c0_i32_0 : i32, i32
  }
  func.func @transform_2(%arg0: i32) -> (i32, i32) {
    %c0_i32 = arith.constant 0 : i32
    %c0_i32_0 = arith.constant 0 : i32
    return %c0_i32, %arg0 : i32, i32
  }
}

</mosaic_0001>

<llo_original>
// kernel: tpu_custom_call.1
$region0: #{tpu_custom_call.1}
  #allocation0 [shape = 'u32[]', space=smem, size = 0x4, offset = 0x4, fixed_abs, tag = 'smem constant byte address 0x4 - core index']
  #allocation1 [shape = 'u32[144,128]{1,0:T(1,128)}', space=vmem, size = 0x12000, scoped, tag = 'internal scratch']
  %s0 = inlined_call_operand.hbm [shape: f32[9,256], index: 0, kind: input, shape index: {}]
  %s1 = inlined_call_operand.hbm [shape: f32[8,9], index: 1, kind: input, shape index: {}]
  %s2 = inlined_call_operand.hbm [shape: f32[8,256], index: 2, kind: output, shape index: {}]
  %s3 = sld [smem:[#allocation0]]
  $region49: #{tpu_custom_call.1} parent=0
    _
  %s5 = ssub.s32 1, %s3
  %s6 = scalar_select 0, %s5, %s3
  $region1: #{tpu_custom_call.1} parent=0
    #allocation2 [shape = 'u8[16384]{0}', space=vmem, size = 0x4000, scoped, tag = 'input window, operand 0']
    #allocation3 [shape = 's32[2]{0}', space=sflag, size = 0x8, scoped, tag = 'scoped memory for tpu_custom_call.1']
    #allocation4 [shape = 's32[2]{0}', space=sflag, size = 0x8, scoped, tag = 'scoped memory for tpu_custom_call.1']
    #allocation5 [shape = 'u8[4096]{0}', space=vmem, size = 0x1000, scoped, tag = 'input window, operand 1, single buffered']
    #allocation6 [shape = 's32[1]{0}', space=sflag, size = 0x4, scoped, tag = 'scoped memory for tpu_custom_call.1']
    #allocation7 [shape = 'u8[8192]{0}', space=vmem, size = 0x2000, scoped, tag = 'output window, operand 0']
    %7 = vsyncpa [#allocation3], 0
    %s8 = scalar_lea.sflag [#allocation3], 1
    %9 = vsyncpa %s8, 0
    %10 = vsyncpa [#allocation6], 0
    %11 = vsyncpa [#allocation4], 0
    %s12 = scalar_lea.sflag [#allocation4], 1
    %13 = vsyncpa %s12, 0
    loop: start=0, step=1, limit=4
    $region2: #{tpu_custom_call.1} parent=1 // loop_pre_header
      _
    $region3: #{tpu_custom_call.1} parent=1 // loop_header
      %s15 = sphi 0, %s19
      %p16 = scmp.ge.s32.totalorder %s15, 4
      %s25 = sphi 0, %s27
      %s28 = sphi 0, %s25
      %s29 = sphi 0, %s28
      %s45 = sphi 0, %s29
      %s49 = sphi 0, %s49
      %s51 = sphi 0, %s49
      %s52 = sphi 0, %s51
      %s66 = sphi 0, %s52
      %s72 = sphi 0, %s74
      %s75 = sphi 0, %s72
      %s76 = sphi 0, %s75
      %s92 = sphi 0, %s76
    $region4: #{tpu_custom_call.1} parent=1 // loop_header_branch
      %18 = sbr.rel (%p16) target = $region8
    $region5: #{tpu_custom_call.1} parent=1 // loop_body
      %s20 = ssub.s32 %s15, 1
      %s21 = ssub.s32 %s15, 2
      %s22 = sadd.s32 %s15, 1
      %s23 = ssub.s32 %s15, %s22
      %p24 = scmp.eq.s32.totalorder %s23, 0
      %s26 = sadd.s32 %s25, 1
      %s27 = scalar_select %p24, %s25, %s26
      %p30 = pneg %p24
      %p31 = scmp.eq.s32.totalorder %s15, 1
      %p32 = por %p30, %p31
      %p33 = scmp.ne.s32.totalorder %s25, %s28
      %p34 = scmp.eq.s32.totalorder %s15, 0
      %p35 = por %p33, %p34
      %p36 = scmp.ne.s32.totalorder %s25, %s28
      %p37 = scmp.eq.s32.totalorder %s20, 1
      %p38 = por %p36, %p37
      %p39 = scmp.ne.s32.totalorder %s28, %s29
      %p40 = scmp.eq.s32.totalorder %s20, 0
      %p41 = por %p39, %p40
      %p42 = scmp.ne.s32.totalorder %s28, %s29
      %p43 = scmp.eq.s32.totalorder %s21, 1
      %p44 = por %p42, %p43
      %p46 = scmp.ne.s32.totalorder %s29, %s45
      %p47 = scmp.eq.s32.totalorder %s21, 0
      %p48 = por %p46, %p47
      %s50 = sadd.s32 %s49, 1
      %p53 = scmp.eq.s32.totalorder %s15, 1
      %p54 = scmp.ne.s32.totalorder %s49, %s51
      %p55 = scmp.eq.s32.totalorder %s15, 0
      %p56 = por %p54, %p55
      %p57 = scmp.ne.s32.totalorder %s49, %s51
      %p58 = scmp.eq.s32.totalorder %s20, 1
      %p59 = por %p57, %p58
      %p60 = scmp.ne.s32.totalorder %s51, %s52
      %p61 = scmp.eq.s32.totalorder %s20, 0
      %p62 = por %p60, %p61
      %p63 = scmp.ne.s32.totalorder %s51, %s52
      %p64 = scmp.eq.s32.totalorder %s21, 1
      %p65 = por %p63, %p64
      %p67 = scmp.ne.s32.totalorder %s52, %s66
      %p68 = scmp.eq.s32.totalorder %s21, 0
      %p69 = por %p67, %p68
      %s70 = ssub.s32 %s15, %s22
      %p71 = scmp.eq.s32.totalorder %s70, 0
      %s73 = sadd.s32 %s72, 1
      %s74 = scalar_select %p71, %s72, %s73
      %p77 = pneg %p71
      %p78 = scmp.eq.s32.totalorder %s15, 1
      %p79 = por %p77, %p78
      %p80 = scmp.ne.s32.totalorder %s72, %s75
      %p81 = scmp.eq.s32.totalorder %s15, 0
      %p82 = por %p80, %p81
      %p83 = scmp.ne.s32.totalorder %s72, %s75
      %p84 = scmp.eq.s32.totalorder %s20, 1
      %p85 = por %p83, %p84
      %p86 = scmp.ne.s32.totalorder %s75, %s76
      %p87 = scmp.eq.s32.totalorder %s20, 0
      %p88 = por %p86, %p87
      %p89 = scmp.ne.s32.totalorder %s75, %s76
      %p90 = scmp.eq.s32.totalorder %s21, 1
      %p91 = por %p89, %p90
      %p93 = scmp.ne.s32.totalorder %s76, %s92
      %p94 = scmp.eq.s32.totalorder %s21, 0
      %p95 = por %p93, %p94
      %p96 = scmp.le.s32.totalorder 1, %s15
      %p97 = scmp.lt.s32.totalorder %s15, 3
      %p98 = pnand %p96, %p97
      %p99 = pneg %p98
      // Predicated region
      $region9: #{tpu_custom_call.1} parent=5 // pred_check
        _
      $region10: #{tpu_custom_call.1} parent=5 // pred_check_branch
        %101 = sbr.rel (%p98) target = $region12
      $region11: #{tpu_custom_call.1} parent=5 // pred_region
        %s102 = ssub.s32 %s15, 1
        // Predicated region
        $region13: #{tpu_custom_call.1} parent=11 // pred_check
          %p103 = pneg %p62
        $region14: #{tpu_custom_call.1} parent=11 // pred_check_branch
          %105 = sbr.rel (%p103) target = $region16
        $region15: #{tpu_custom_call.1} parent=11 // pred_region
          %s107 = ssub.s32 128, 128
          %108 = vsyncadd [#allocation6], %s107
          %s110 = sshll.u32 [#allocation5], 4
          %s111 = int_to_ptr.vmem [resolvable:$true] %s110
          %113 = dma.hbm_to_vmem [thread:$0]  %s1, 128, %s111, [#allocation6]
        $region16: #{tpu_custom_call.1} parent=11 // pred_fallthru
          _
      $region12: #{tpu_custom_call.1} parent=5 // pred_fallthru
        _
      %p114 = scmp.lt.s32.totalorder %s15, 2
      // Predicated region
      $region17: #{tpu_custom_call.1} parent=5 // pred_check
        %p115 = pneg %p114
      $region18: #{tpu_custom_call.1} parent=5 // pred_check_branch
        %117 = sbr.rel (%p115) target = $region20
      $region19: #{tpu_custom_call.1} parent=5 // pred_region
        // Predicated region
        $region21: #{tpu_custom_call.1} parent=19 // pred_check
          %p118 = pneg %p35
        $region22: #{tpu_custom_call.1} parent=19 // pred_check_branch
          %120 = sbr.rel (%p118) target = $region24
        $region23: #{tpu_custom_call.1} parent=19 // pred_region
          %s121 = sand.u32 %s25, 1
          %s122 = scalar_lea.sflag [#allocation3], %s121
          %s123 = sand.u32 %s25, 1
          %s124 = smul.addr %s123, 16
          %s125 = scalar_lea.vmem [#allocation2], %s124
          %s127 = ssub.s32 256, 256
          %128 = vsyncadd %s122, %s127
          %s129 = smul.addr %s15, 128
          %s130 = scalar_lea.hbm %s0, %s129
          %s131 = sshll.u32 %s125, 4
          %s132 = int_to_ptr.vmem [resolvable:$true] %s131
          %137 = dma.hbm_to_vmem [thread:$0]  %s130, 256, %s132, %s122, 256, 128, 8
        $region24: #{tpu_custom_call.1} parent=19 // pred_fallthru
          _
      $region20: #{tpu_custom_call.1} parent=5 // pred_fallthru
        _
      %p138 = scmp.le.s32.totalorder 1, %s15
      %p139 = scmp.lt.s32.totalorder %s15, 3
      %p140 = pnand %p138, %p139
      %p141 = pneg %p140
      // Predicated region
      $region25: #{tpu_custom_call.1} parent=5 // pred_check
        _
      $region26: #{tpu_custom_call.1} parent=5 // pred_check_branch
        %143 = sbr.rel (%p140) target = $region28
      $region27: #{tpu_custom_call.1} parent=5 // pred_region
        %s144 = ssub.s32 %s15, 1
        %s145 = sand.u32 %s28, 1
        %s146 = scalar_lea.sflag [#allocation3], %s145
        %s147 = sand.u32 %s28, 1
        %s148 = smul.addr %s147, 16
        %s149 = scalar_lea.vmem [#allocation2], %s148
        // Predicated region
        $region29: #{tpu_custom_call.1} parent=27 // pred_check
          %p150 = pneg %p41
        $region30: #{tpu_custom_call.1} parent=27 // pred_check_branch
          %152 = sbr.rel (%p150) target = $region32
        $region31: #{tpu_custom_call.1} parent=27 // pred_region
          %153 = dma.done %s146, 256
        $region32: #{tpu_custom_call.1} parent=27 // pred_fallthru
          _
        // Predicated region
        $region33: #{tpu_custom_call.1} parent=27 // pred_check
          %p154 = pneg %p62
        $region34: #{tpu_custom_call.1} parent=27 // pred_check_branch
          %156 = sbr.rel (%p154) target = $region36
        $region35: #{tpu_custom_call.1} parent=27 // pred_region
          %157 = dma.done [#allocation6], 128
        $region36: #{tpu_custom_call.1} parent=27 // pred_fallthru
          _
        %s158 = sand.u32 %s28, 1
        %s159 = scalar_lea.sflag [#allocation3], %s158
        %s160 = sand.u32 %s28, 1
        %s161 = smul.addr %s160, 16
        %s162 = scalar_lea.vmem [#allocation2], %s161
        %p163 = pneg %p41
        %p164 = pneg %p38
        %p165 = pneg %p62
        %p166 = pneg %p59
        %p167 = pneg %p88
        %p168 = pneg %p85
        %s169 = sand.u32 %s75, 1
        %s170 = scalar_lea.sflag [#allocation4], %s169
        %s171 = sand.u32 %s75, 1
        %s172 = smul.addr %s171, 8
        %s173 = scalar_lea.vmem [#allocation7], %s172
        %v174 = vld [vmem:[#allocation5] sm:$0xff]
        %v175 = vld [vmem:[%s149] sm:$0xff]
        %v176 = vld [vmem:[%s149 + $0x8] sm:$0x1]
        %vm177 = vcmask 72704
        %v179 = vsel %vm177, %v174, 0
        %vm181 = vcmask 1040384
        %v183 = vsel %vm181, %v176, 0
        %185 = vmatprep.subr.mxu0 0.0
        %186 = vmatpush1.msra.mxu0 %v175
        %187 = vmatprep.subr.mxu0 0.0
        %188 = vmatpush1.msra.mxu0 %v183
        %189 = vmatprep.subr.mxu0 0.0
        %190 = vmatpush1.msra.mxu0 0.0
        %191 = vmatprep.subr.mxu0 0.0
        %192 = vmatpush1.msra.mxu0 0.0
        %193 = vmatprep.subr.mxu0 0.0
        %194 = vmatpush1.msra.mxu0 0.0
        %195 = vmatprep.subr.mxu0 0.0
        %196 = vmatpush1.msra.mxu0 0.0
        %197 = vmatprep.subr.mxu0 0.0
        %198 = vmatpush1.msra.mxu0 0.0
        %199 = vmatprep.subr.mxu0 0.0
        %200 = vmatpush1.msra.mxu0 0.0
        %201 = vmatprep.subr.mxu0 0.0
        %202 = vmatpush1.msra.mxu0 0.0
        %203 = vmatprep.subr.mxu0 0.0
        %204 = vmatpush1.msra.mxu0 0.0
        %205 = vmatprep.subr.mxu0 0.0
        %206 = vmatpush1.msra.mxu0 0.0
        %207 = vmatprep.subr.mxu0 0.0
        %208 = vmatpush1.msra.mxu0 0.0
        %209 = vmatprep.subr.mxu0 0.0
        %210 = vmatpush1.msra.mxu0 0.0
        %211 = vmatprep.subr.mxu0 0.0
        %212 = vmatpush1.msra.mxu0 0.0
        %213 = vmatprep.subr.mxu0 0.0
        %214 = vmatpush1.msra.mxu0 0.0
        %215 = vmatprep.subr.mxu0 0.0
        %216 = vmatpush1.msra.mxu0 0.0
        %217 = vmatprep.subr.mxu0 0.0
        %218 = vmatpush1.msra.mxu0 0.0
        %219 = vmatprep.subr.mxu0 0.0
        %220 = vmatpush1.msra.mxu0 0.0
        %221 = vmatprep.subr.mxu0 0.0
        %222 = vmatpush1.msra.mxu0 0.0
        %223 = vmatprep.subr.mxu0 0.0
        %224 = vmatpush1.msra.mxu0 0.0
        %225 = vmatprep.subr.mxu0 0.0
        %226 = vmatpush1.msra.mxu0 0.0
        %227 = vmatprep.subr.mxu0 0.0
        %228 = vmatpush1.msra.mxu0 0.0
        %229 = vmatprep.subr.mxu0 0.0
        %230 = vmatpush1.msra.mxu0 0.0
        %231 = vmatprep.subr.mxu0 0.0
        %232 = vmatpush1.msra.mxu0 0.0
        %233 = vmatprep.subr.mxu0 0.0
        %234 = vmatpush1.msra.mxu0 0.0
        %235 = vmatprep.subr.mxu0 0.0
        %236 = vmatpush1.msra.mxu0 0.0
        %237 = vmatprep.subr.mxu0 0.0
        %238 = vmatpush1.msra.mxu0 0.0
        %239 = vmatprep.subr.mxu0 0.0
        %240 = vmatpush1.msra.mxu0 0.0
        %241 = vmatprep.subr.mxu0 0.0
        %242 = vmatpush1.msra.mxu0 0.0
        %243 = vmatprep.subr.mxu0 0.0
        %244 = vmatpush1.msra.mxu0 0.0
        %245 = vmatprep.subr.mxu0 0.0
        %246 = vmatpush1.msra.mxu0 0.0
        %247 = vmatprep.subr.mxu0 0.0
        %248 = vmatpush1.msra.mxu0 0.0
        %249 = vmatprep.mubr.f32.mxu0 0.0
        %250 = vmatmul.mubr.f32.gmra.mrb[0].mxu0 %v179
        %v251 = vpop.f32.mrb[0].mxu0
        %v252 = vadd.f32 0.0, %v251
        %v253 = vpop.f32.mrb[0].mxu0
        %254 = vdwg.mxu0
        %255 = vst [vmem:[%s173] sm:$0xff] %v252
        %s256 = sand.u32 %s75, 1
        %s257 = scalar_lea.sflag [#allocation4], %s256
        %s258 = sand.u32 %s75, 1
        %s259 = smul.addr %s258, 8
        %s260 = scalar_lea.vmem [#allocation7], %s259
        // Predicated region
        $region37: #{tpu_custom_call.1} parent=27 // pred_check
          %p261 = pneg %p85
        $region38: #{tpu_custom_call.1} parent=27 // pred_check_branch
          %263 = sbr.rel (%p261) target = $region40
        $region39: #{tpu_custom_call.1} parent=27 // pred_region
          %s265 = ssub.s32 128, 128
          %266 = vsyncadd %s257, %s265
          %s267 = smul.addr %s20, 128
          %s268 = scalar_lea.hbm %s2, %s267
          %s270 = sshll.u32 %s260, 4
          %s271 = int_to_ptr.vmem [resolvable:$true] %s270
          %273 = dma.vmem_to_hbm [thread:$0]  %s271, 128, %s268, %s257
        $region40: #{tpu_custom_call.1} parent=27 // pred_fallthru
          _
      $region28: #{tpu_custom_call.1} parent=5 // pred_fallthru
        _
      %p274 = scmp.le.s32.totalorder 2, %s15
      // Predicated region
      $region41: #{tpu_custom_call.1} parent=5 // pred_check
        %p275 = pneg %p274
      $region42: #{tpu_custom_call.1} parent=5 // pred_check_branch
        %277 = sbr.rel (%p275) target = $region44
      $region43: #{tpu_custom_call.1} parent=5 // pred_region
        %s278 = ssub.s32 %s15, 2
        // Predicated region
        $region45: #{tpu_custom_call.1} parent=43 // pred_check
          %p279 = pneg %p91
        $region46: #{tpu_custom_call.1} parent=43 // pred_check_branch
          %281 = sbr.rel (%p279) target = $region48
        $region47: #{tpu_custom_call.1} parent=43 // pred_region
          %s282 = sand.u32 %s76, 1
          %s283 = scalar_lea.sflag [#allocation4], %s282
          %s284 = sand.u32 %s76, 1
          %s285 = smul.addr %s284, 8
          %s286 = scalar_lea.vmem [#allocation7], %s285
          %287 = dma.done %s283, 128
        $region48: #{tpu_custom_call.1} parent=43 // pred_fallthru
          _
      $region44: #{tpu_custom_call.1} parent=5 // pred_fallthru
        _
    $region6: #{tpu_custom_call.1} parent=1 // loop_footer
      %s19 = sadd.s32 1, %s15
    $region7: #{tpu_custom_call.1} parent=1 // loop_footer_branch
      %14 = sbr.rel target = $region3
    $region8: #{tpu_custom_call.1} parent=1 // loop_exit
      _
    %288 = vsyncpa [#allocation3], 1
    %s289 = scalar_lea.sflag [#allocation3], 1
    %290 = vsyncpa %s289, 1
    %291 = vsyncpa [#allocation6], 1
    %292 = vsyncpa [#allocation4], 1
    %s293 = scalar_lea.sflag [#allocation4], 1
    %294 = vsyncpa %s293, 1

</llo_original>
